<compile_context>
chip_gen: v7x
topology: tpu7x:2x2x1
jax: 0.10.0
libtpu: 0.0.40
codegen_flags: <defaults>
</compile_context>

<pallas_src>
import functools

import jax
import jax.numpy as jnp
from jax import lax
from jax.experimental import pallas as pl
from jax.experimental.pallas import tpu as pltpu

# Conv hyper-params (CycleGAN discriminator ConvBlock kwargs)
KSIZE = 4
STRIDE = 2
PAD = 1
EPS = 1e-5          # InstanceNorm2d default eps
NEG_SLOPE = 0.2     # LeakyReLU(0.2)

C_TILE = 128        # output-channel tile (lane width)


def _round_up(v, m):
    return -(-v // m) * m


def _conv_block_kernel(x_ref, w_ref, o_ref, *, n_row_tiles, row_tile, n_valid):
    """One (batch image, C_out tile) per grid step.

    x_ref: (n_rows_p, 16*C_in) bf16   im2col-in-s2d-domain rows for this image (zero row padding)
    w_ref: (16*C_in, C_TILE)   bf16   weight slab for this C_out tile (zero channel padding)
    o_ref: (n_rows_p, C_TILE)  bf16   pass 1 stashes pre-norm y here, pass 2 overwrites with the
                                      normalised + activated result (all in VMEM; HBM write after)
    """
    w = w_ref[...]                                   # (K, C) bf16, hoisted out of the loops
    c_tile = o_ref.shape[1]

    # ---- Pass 1: conv matmul per row tile; accumulate InstanceNorm stats in f32.
    def pass1(t, carry):
        s1, s2 = carry
        r0 = pl.multiple_of(t * row_tile, row_tile)
        y = jnp.dot(x_ref[pl.ds(r0, row_tile), :], w,
                    preferred_element_type=jnp.float32)        # (row_tile, C) f32 on the MXU
        o_ref[pl.ds(r0, row_tile), :] = y.astype(o_ref.dtype)  # stash pre-norm y (bf16)
        return (s1 + jnp.sum(y, axis=0, keepdims=True),
                s2 + jnp.sum(y * y, axis=0, keepdims=True))

    zero = jnp.zeros((1, c_tile), jnp.float32)
    s1, s2 = lax.fori_loop(0, n_row_tiles, pass1, (zero, zero))

    # ---- InstanceNorm stats (zero-padded rows contribute 0 to the sums; divide by real count).
    inv_cnt = 1.0 / float(n_valid)
    mean = s1 * inv_cnt
    var = jnp.maximum(s2 * inv_cnt - mean * mean, 0.0)          # clamp against cancellation
    inv_std = lax.rsqrt(var + EPS)                              # EUP

    # Hoist broadcasts out of the pass-2 loop (JAX does not CSE broadcast_in_dim).
    mean_b = jnp.broadcast_to(mean, (row_tile, c_tile))
    pos_b = jnp.broadcast_to(inv_std, (row_tile, c_tile))
    neg_b = NEG_SLOPE * pos_b

    # ---- Pass 2: normalise + LeakyReLU fused into a single select-scale multiply.
    def pass2(t, carry):
        r0 = pl.multiple_of(t * row_tile, row_tile)
        yc = o_ref[pl.ds(r0, row_tile), :].astype(jnp.float32) - mean_b
        o_ref[pl.ds(r0, row_tile), :] = (
            yc * jnp.where(yc >= 0.0, pos_b, neg_b)).astype(o_ref.dtype)
        return carry

    lax.fori_loop(0, n_row_tiles, pass2, 0)


def conv_block(x, weight, bias=None, *, channels_last=False, out_dtype=jnp.bfloat16):
    """x: (N, C_in, H, W) NCHW f32; weight: (C_out, C_in, 4, 4); bias is unused (exact no-op under
    InstanceNorm2d(affine=False): per-channel constants are removed by the mean subtraction).

    Returns NCHW (default) or NHWC (`channels_last=True`, skips one transpose for chained blocks),
    in `out_dtype` (bf16 by default: downstream blocks consume bf16, writeback is halved)."""
    n, c_in, h, w_dim = x.shape
    c_out = weight.shape[0]
    assert weight.shape == (c_out, c_in, KSIZE, KSIZE)

    hp, wp = h + 2 * PAD, w_dim + 2 * PAD
    assert hp % 2 == 0 and wp % 2 == 0, "H and W must be even for this stride-2 block"
    hs, ws = hp // 2, wp // 2                 # space-to-depth spatial dims
    ho, wo = hs - 1, ws - 1                   # conv output dims == (hp - K)//S + 1
    n_rows = ho * wo                          # one matmul row per real output pixel
    kdim = 16 * c_in                          # (dh, dw, c, ph, pw) folded into K

    c_out_p = _round_up(c_out, C_TILE)        # lane-dense output stores / full MXU N dim
    n_ctiles = c_out_p // C_TILE

    row_tile = min(512, _round_up(n_rows, 16))     # multiple of 16 -> aligned bf16 sublane slices
    n_rows_p = _round_up(n_rows, row_tile)
    n_row_tiles = n_rows_p // row_tile

    # ---- input: pad -> space-to-depth -> gather the 2x2 s2d-cell window per output pixel.
    #      Rows are exactly the Ho*Wo output positions (no garbage column -> no mask needed).
    xb = x.astype(jnp.bfloat16)
    xp = jnp.pad(xb, ((0, 0), (0, 0), (PAD, PAD), (PAD, PAD)))
    xs = xp.reshape(n, c_in, hs, 2, ws, 2).transpose(0, 2, 4, 1, 3, 5)   # (N,Hs,Ws,C,ph,pw)
    xs = xs.reshape(n, hs, ws, 4 * c_in)
    xg = jnp.concatenate(
        [xs[:, dh:dh + ho, dw:dw + wo, :] for dh in (0, 1) for dw in (0, 1)],
        axis=-1)                                                          # (N,Ho,Wo,16C)
    xflat = xg.reshape(n, n_rows, kdim)
    if n_rows_p > n_rows:
        xflat = jnp.pad(xflat, ((0, 0), (0, n_rows_p - n_rows), (0, 0)))  # zero rows: 0 in stats

    # ---- weight: (O,C,4,4) -> (dh,dw,c,ph,pw, O) bf16, zero-pad O to a multiple of 128.
    #      Bias intentionally dropped (cancelled by the InstanceNorm mean subtraction).
    w6 = weight.astype(jnp.bfloat16).reshape(c_out, c_in, 2, 2, 2, 2)     # (o,c,dh,ph,dw,pw)
    wmat = w6.transpose(2, 4, 1, 3, 5, 0).reshape(kdim, c_out)
    if c_out_p > c_out:
        wmat = jnp.pad(wmat, ((0, 0), (0, c_out_p - c_out)))

    kernel = functools.partial(_conv_block_kernel, n_row_tiles=n_row_tiles,
                               row_tile=row_tile, n_valid=n_rows)

    # ---- VMEM budget derived from the actual (lane/sublane padded) shapes + headroom.
    o_bpe = jnp.dtype(out_dtype).itemsize
    x_buf = _round_up(n_rows_p, 16) * _round_up(kdim, 128) * 2
    w_buf = _round_up(kdim, 16) * C_TILE * 2
    o_buf = _round_up(n_rows_p, 16) * C_TILE * o_bpe
    tmp = 8 * row_tile * C_TILE * 4                      # tile-sized f32 temporaries
    vmem_limit = int(min(max(2 * (x_buf + w_buf + o_buf) + tmp + (4 << 20), 32 << 20), 64 << 20))

    flops = 2 * n * n_rows_p * kdim * c_out_p
    bytes_accessed = (n * n_rows_p * kdim * 2 + kdim * c_out_p * 2
                      + n * n_rows_p * c_out_p * o_bpe)

    out = pl.pallas_call(
        kernel,
        out_shape=jax.ShapeDtypeStruct((n, n_rows_p, c_out_p), out_dtype),
        grid_spec=pltpu.PrefetchScalarGridSpec(
            num_scalar_prefetch=0,
            grid=(n, n_ctiles),
            in_specs=[
                # image rows: constant across the C_out-tile axis -> not re-DMA'd per tile
                pl.BlockSpec((None, n_rows_p, kdim), lambda i, j: (i, 0, 0)),
                # weight slab for this C_out tile (KB–MB scale)
                pl.BlockSpec((kdim, C_TILE), lambda i, j: (0, j)),
            ],
            out_specs=pl.BlockSpec((None, n_rows_p, C_TILE), lambda i, j: (i, 0, j)),
        ),
        compiler_params=pltpu.CompilerParams(
            dimension_semantics=("parallel", "parallel"),
            vmem_limit_bytes=vmem_limit,
        ),
        cost_estimate=pl.CostEstimate(
            flops=flops, transcendentals=n * c_out_p, bytes_accessed=bytes_accessed),
    )(xflat, wmat)

    # drop row / channel padding (layout plumbing only)
    y = out[:, :n_rows, :c_out].reshape(n, ho, wo, c_out)
    if channels_last:
        return y
    return jnp.transpose(y, (0, 3, 1, 2))


def _reference(x, weight, bias):
    """Pure-JAX f32 reference of Conv2d -> InstanceNorm2d -> LeakyReLU(0.2)."""
    y = lax.conv_general_dilated(
        x, weight,
        window_strides=(STRIDE, STRIDE),
        padding=[(PAD, PAD), (PAD, PAD)],
        dimension_numbers=("NCHW", "OIHW", "NCHW"),
        precision=lax.Precision.HIGHEST,
    ) + bias.reshape(1, -1, 1, 1)
    mean = jnp.mean(y, axis=(2, 3), keepdims=True)
    var = jnp.mean((y - mean) ** 2, axis=(2, 3), keepdims=True)
    yn = (y - mean) * lax.rsqrt(var + EPS)
    return jnp.where(yn >= 0, yn, NEG_SLOPE * yn)


if __name__ == "__main__":
    key = jax.random.PRNGKey(0)
    kx, kw, kb = jax.random.split(key, 3)

    N, C_IN, H, W = 2, 4, 16, 16
    C_OUT = 8

    x = jax.random.normal(kx, (N, C_IN, H, W), dtype=jnp.float32)
    fan_in = C_IN * KSIZE * KSIZE
    bound = 1.0 / (fan_in ** 0.5)
    weight = jax.random.uniform(kw, (C_OUT, C_IN, KSIZE, KSIZE),
                                minval=-bound, maxval=bound, dtype=jnp.float32)
    bias = jax.random.uniform(kb, (C_OUT,), minval=-bound, maxval=bound,
                              dtype=jnp.float32)

    out = jax.block_until_ready(jax.jit(conv_block)(x, weight, bias))
    assert out.shape == (N, C_OUT, H // 2, W // 2), out.shape
    assert out.dtype == jnp.bfloat16, out.dtype
    out32 = out.astype(jnp.float32)

    # Check vs a reference fed the same bf16-quantized operands (isolates kernel math; residual
    # error is the bf16 stash/output quantization of O(1) normalized values).
    xq = x.astype(jnp.bfloat16).astype(jnp.float32)
    wq = weight.astype(jnp.bfloat16).astype(jnp.float32)
    ref_q = _reference(xq, wq, bias)
    assert jnp.allclose(out32, ref_q, atol=4e-2, rtol=4e-2), \
        float(jnp.max(jnp.abs(out32 - ref_q)))

    # Loose check vs the full-f32 reference (adds bf16 operand quantization).
    ref = _reference(x, weight, bias)
    assert jnp.allclose(out32, ref, atol=1e-1, rtol=1e-1), \
        float(jnp.max(jnp.abs(out32 - ref)))

    print("KERNEL_OK")
</pallas_src>

<mosaic_0001>
module attributes {stable_mosaic.version = 11 : i64} {
  func.func @_conv_block_kernel(%arg0: i32, %arg1: i32, %arg2: memref<1x64x64xbf16, #tpu.memory_space<vmem>>, %arg3: memref<64x128xbf16, #tpu.memory_space<vmem>>, %arg4: memref<1x64x128xbf16, #tpu.memory_space<vmem>>) attributes {dimension_semantics = [#tpu.dimension_semantics<parallel>, #tpu.dimension_semantics<parallel>], iteration_bounds = array<i64: 2, 1>, scalar_prefetch = 0 : i64, scratch_operands = 0 : i64, tpu.core_type = #tpu.core_type<tc>, window_params = [{transform_indices = @transform_0, window_bounds = array<i64: 1, 64, 64>}, {transform_indices = @transform_1, window_bounds = array<i64: 64, 128>}, {transform_indices = @transform_2, window_bounds = array<i64: 1, 64, 128>}]} {
    %c0 = arith.constant 0 : index
    %c0_0 = arith.constant 0 : index
    %0 = vector.load %arg3[%c0, %c0_0] : memref<64x128xbf16, #tpu.memory_space<vmem>>, vector<64x128xbf16>
    %cst = arith.constant 0.000000e+00 : f32
    %1 = vector.broadcast %cst : f32 to vector<1x128xf32>
    %c0_i32 = arith.constant 0 : i32
    %c64_i32 = arith.constant 64 : i32
    %2 = arith.muli %c0_i32, %c64_i32 : i32
    %3 = tpu.assume_multiple %2, 64 : i32
    %c0_1 = arith.constant 0 : index
    %4 = arith.index_cast %3 : i32 to index
    %c0_2 = arith.constant 0 : index
    %5 = vector.load %arg2[%c0_1, %4, %c0_2] : memref<1x64x64xbf16, #tpu.memory_space<vmem>>, vector<1x64x64xbf16>
    %6 = vector.shape_cast %5 : vector<1x64x64xbf16> to vector<64x64xbf16>
    %cst_3 = arith.constant dense<0.000000e+00> : vector<64x128xf32>
    %7 = tpu.matmul %6, %0, %cst_3 {dimension_numbers = #tpu.dot_dimension_numbers<[1], [0], [0], [1], [0, 0, 1, 1], [], []>} : vector<64x64xbf16>, vector<64x128xbf16>, vector<64x128xf32> -> vector<64x128xf32>
    %8 = arith.truncf %7 : vector<64x128xf32> to vector<64x128xbf16>
    %c0_4 = arith.constant 0 : index
    %9 = arith.index_cast %3 : i32 to index
    %c0_5 = arith.constant 0 : index
    %10 = vector.load %arg4[%c0_4, %9, %c0_5] : memref<1x64x128xbf16, #tpu.memory_space<vmem>>, vector<1x64x128xbf16>
    %11 = vector.shape_cast %10 : vector<1x64x128xbf16> to vector<64x128xbf16>
    %12 = vector.shape_cast %8 : vector<64x128xbf16> to vector<1x64x128xbf16>
    tpu.vector_store %arg4[%c0_4, %9, %c0_5], %12 {strides = array<i32>} : memref<1x64x128xbf16, #tpu.memory_space<vmem>>, vector<1x64x128xbf16>,
    %cst_6 = arith.constant dense<0.000000e+00> : vector<128xf32>
    %13 = vector.multi_reduction <add>, %7, %cst_6 [0] : vector<64x128xf32> to vector<128xf32>
    %14 = vector.shape_cast %13 : vector<128xf32> to vector<1x128xf32>
    %15 = arith.addf %1, %14 : vector<1x128xf32>
    %16 = arith.mulf %7, %7 : vector<64x128xf32>
    %cst_7 = arith.constant dense<0.000000e+00> : vector<128xf32>
    %17 = vector.multi_reduction <add>, %16, %cst_7 [0] : vector<64x128xf32> to vector<128xf32>
    %18 = vector.shape_cast %17 : vector<128xf32> to vector<1x128xf32>
    %19 = arith.addf %1, %18 : vector<1x128xf32>
    %c1_i32 = arith.constant 1 : i32
    %cst_8 = arith.constant 1.562500e-02 : f32
    %20 = vector.broadcast %cst_8 : f32 to vector<1x128xf32>
    %21 = arith.mulf %15, %20 : vector<1x128xf32>
    %cst_9 = arith.constant 1.562500e-02 : f32
    %22 = vector.broadcast %cst_9 : f32 to vector<1x128xf32>
    %23 = arith.mulf %19, %22 : vector<1x128xf32>
    %24 = arith.mulf %21, %21 : vector<1x128xf32>
    %25 = arith.subf %23, %24 : vector<1x128xf32>
    %cst_10 = arith.constant 0.000000e+00 : f32
    %26 = vector.broadcast %cst_10 : f32 to vector<1x128xf32>
    %27 = arith.maximumf %25, %26 : vector<1x128xf32>
    %cst_11 = arith.constant 9.99999974E-6 : f32
    %28 = vector.broadcast %cst_11 : f32 to vector<1x128xf32>
    %29 = arith.addf %27, %28 : vector<1x128xf32>
    %30 = math.rsqrt %29 : vector<1x128xf32>
    %31 = vector.shape_cast %21 : vector<1x128xf32> to vector<1x128xf32>
    %32 = vector.broadcast %31 : vector<1x128xf32> to vector<64x128xf32>
    %33 = vector.shape_cast %30 : vector<1x128xf32> to vector<1x128xf32>
    %34 = vector.broadcast %33 : vector<1x128xf32> to vector<64x128xf32>
    %cst_12 = arith.constant 2.000000e-01 : f32
    %35 = vector.broadcast %cst_12 : f32 to vector<64x128xf32>
    %36 = arith.mulf %35, %34 : vector<64x128xf32>
    %c0_i32_13 = arith.constant 0 : i32
    %c64_i32_14 = arith.constant 64 : i32
    %37 = arith.muli %c0_i32_13, %c64_i32_14 : i32
    %38 = tpu.assume_multiple %37, 64 : i32
    %c0_15 = arith.constant 0 : index
    %39 = arith.index_cast %38 : i32 to index
    %c0_16 = arith.constant 0 : index
    %40 = vector.load %arg4[%c0_15, %39, %c0_16] : memref<1x64x128xbf16, #tpu.memory_space<vmem>>, vector<1x64x128xbf16>
    %41 = vector.shape_cast %40 : vector<1x64x128xbf16> to vector<64x128xbf16>
    %42 = arith.extf %41 : vector<64x128xbf16> to vector<64x128xf32>
    %43 = arith.subf %42, %32 : vector<64x128xf32>
    %cst_17 = arith.constant 0.000000e+00 : f32
    %44 = vector.broadcast %cst_17 : f32 to vector<64x128xf32>
    %45 = arith.cmpf oge, %43, %44 : vector<64x128xf32>
    %46 = arith.select %45, %34, %36 : vector<64x128xi1>, vector<64x128xf32>
    %47 = arith.mulf %43, %46 : vector<64x128xf32>
    %48 = arith.truncf %47 : vector<64x128xf32> to vector<64x128xbf16>
    %c0_18 = arith.constant 0 : index
    %49 = arith.index_cast %38 : i32 to index
    %c0_19 = arith.constant 0 : index
    %50 = vector.load %arg4[%c0_18, %49, %c0_19] : memref<1x64x128xbf16, #tpu.memory_space<vmem>>, vector<1x64x128xbf16>
    %51 = vector.shape_cast %50 : vector<1x64x128xbf16> to vector<64x128xbf16>
    %52 = vector.shape_cast %48 : vector<64x128xbf16> to vector<1x64x128xbf16>
    tpu.vector_store %arg4[%c0_18, %49, %c0_19], %52 {strides = array<i32>} : memref<1x64x128xbf16, #tpu.memory_space<vmem>>, vector<1x64x128xbf16>,
    %c1_i32_20 = arith.constant 1 : i32
    return
  }
  func.func @transform_0(%arg0: i32, %arg1: i32) -> (i32, i32, i32) {
    %c0_i32 = arith.constant 0 : i32
    %c0_i32_0 = arith.constant 0 : i32
    %c0_i32_1 = arith.constant 0 : i32
    return %arg0, %c0_i32, %c0_i32_0 : i32, i32, i32
  }
  func.func @transform_1(%arg0: i32, %arg1: i32) -> (i32, i32) {
    %c0_i32 = arith.constant 0 : i32
    %c0_i32_0 = arith.constant 0 : i32
    return %c0_i32, %arg1 : i32, i32
  }
  func.func @transform_2(%arg0: i32, %arg1: i32) -> (i32, i32, i32) {
    %c0_i32 = arith.constant 0 : i32
    %c0_i32_0 = arith.constant 0 : i32
    return %arg0, %c0_i32, %arg1 : i32, i32, i32
  }
}

</mosaic_0001>

<llo_original>
// kernel: conv_block.1
$region0: #{conv_block.1}
  #allocation0 [shape = 'u32[]', space=smem, size = 0x4, offset = 0x4, fixed_abs, tag = 'smem constant byte address 0x4 - core index']
  #allocation1 [shape = 'u32[144,128]{1,0:T(1,128)}', space=vmem, size = 0x12000, scoped, tag = 'internal scratch']
  %s0 = inlined_call_operand.vmem [shape: bf16[2,64,64], index: 0, kind: input, shape index: {}]
  %s1 = inlined_call_operand.vmem [shape: bf16[64,128], index: 1, kind: input, shape index: {}]
  %s2 = inlined_call_operand.vmem [shape: bf16[2,64,128], index: 2, kind: output, shape index: {}]
  %s3 = sld [smem:[#allocation0]]
  $region41: #{conv_block.1} parent=0
    _
  %s5 = ssub.s32 1, %s3
  %s6 = scalar_select 0, %s5, %s3
  loop: start=0, step=1, limit=4
  $region2: #{conv_block.1} parent=0 // loop_pre_header
    _
  $region3: #{conv_block.1} parent=0 // loop_header
    %s8 = sphi 0, %s12
    %p9 = scmp.ge.s32.totalorder %s8, 4
    %s15 = sphi 0, %s27
    %s16 = sphi 0, %s23
    %s17 = sphi 0, %s15
    %s18 = sphi 0, %s16
    %s19 = sphi 0, %s17
    %s20 = sphi 0, %s18
    %s30 = sphi 0, %s32
    %s33 = sphi 0, %s30
    %s34 = sphi 0, %s33
    %s50 = sphi 0, %s34
    %s56 = sphi 0, %s58
    %s59 = sphi 0, %s56
    %s60 = sphi 0, %s59
    %s76 = sphi 0, %s60
    %s84 = sphi 0, %s86
    %s87 = sphi 0, %s84
    %s88 = sphi 0, %s87
    %s104 = sphi 0, %s88
  $region4: #{conv_block.1} parent=0 // loop_header_branch
    %11 = sbr.rel (%p9) target = $region8
  $region5: #{conv_block.1} parent=0 // loop_body
    %s13 = ssub.s32 %s8, 1
    %s14 = ssub.s32 %s8, 2
    %s21 = sadd.s32 1, %s16
    %p22 = scmp.ge.s32.totalorder %s21, 1
    %s23 = scalar_select %p22, 0, %s21
    %s24 = sadd.s32 1, %s15
    %s25 = scalar_select %p22, %s24, %s15
    %p26 = scmp.ge.s32.totalorder %s25, 2
    %s27 = scalar_select %p26, 0, %s25
    %s28 = ssub.s32 %s15, %s27
    %p29 = scmp.eq.s32.totalorder %s28, 0
    %s31 = sadd.s32 %s30, 1
    %s32 = scalar_select %p29, %s30, %s31
    %p35 = pneg %p29
    %p36 = scmp.eq.s32.totalorder %s8, 1
    %p37 = por %p35, %p36
    %p38 = scmp.ne.s32.totalorder %s30, %s33
    %p39 = scmp.eq.s32.totalorder %s8, 0
    %p40 = por %p38, %p39
    %p41 = scmp.ne.s32.totalorder %s30, %s33
    %p42 = scmp.eq.s32.totalorder %s13, 1
    %p43 = por %p41, %p42
    %p44 = scmp.ne.s32.totalorder %s33, %s34
    %p45 = scmp.eq.s32.totalorder %s13, 0
    %p46 = por %p44, %p45
    %p47 = scmp.ne.s32.totalorder %s33, %s34
    %p48 = scmp.eq.s32.totalorder %s14, 1
    %p49 = por %p47, %p48
    %p51 = scmp.ne.s32.totalorder %s34, %s50
    %p52 = scmp.eq.s32.totalorder %s14, 0
    %p53 = por %p51, %p52
    %s54 = ssub.s32 %s16, %s23
    %p55 = scmp.eq.s32.totalorder %s54, 0
    %s57 = sadd.s32 %s56, 1
    %s58 = scalar_select %p55, %s56, %s57
    %p61 = pneg %p55
    %p62 = scmp.eq.s32.totalorder %s8, 1
    %p63 = por %p61, %p62
    %p64 = scmp.ne.s32.totalorder %s56, %s59
    %p65 = scmp.eq.s32.totalorder %s8, 0
    %p66 = por %p64, %p65
    %p67 = scmp.ne.s32.totalorder %s56, %s59
    %p68 = scmp.eq.s32.totalorder %s13, 1
    %p69 = por %p67, %p68
    %p70 = scmp.ne.s32.totalorder %s59, %s60
    %p71 = scmp.eq.s32.totalorder %s13, 0
    %p72 = por %p70, %p71
    %p73 = scmp.ne.s32.totalorder %s59, %s60
    %p74 = scmp.eq.s32.totalorder %s14, 1
    %p75 = por %p73, %p74
    %p77 = scmp.ne.s32.totalorder %s60, %s76
    %p78 = scmp.eq.s32.totalorder %s14, 0
    %p79 = por %p77, %p78
    %s80 = ssub.s32 %s15, %s27
    %s81 = ssub.s32 %s16, %s23
    %s82 = sor.u32 %s80, %s81
    %p83 = scmp.eq.s32.totalorder %s82, 0
    %s85 = sadd.s32 %s84, 1
    %s86 = scalar_select %p83, %s84, %s85
    %p89 = pneg %p83
    %p90 = scmp.eq.s32.totalorder %s8, 1
    %p91 = por %p89, %p90
    %p92 = scmp.ne.s32.totalorder %s84, %s87
    %p93 = scmp.eq.s32.totalorder %s8, 0
    %p94 = por %p92, %p93
    %p95 = scmp.ne.s32.totalorder %s84, %s87
    %p96 = scmp.eq.s32.totalorder %s13, 1
    %p97 = por %p95, %p96
    %p98 = scmp.ne.s32.totalorder %s87, %s88
    %p99 = scmp.eq.s32.totalorder %s13, 0
    %p100 = por %p98, %p99
    %p101 = scmp.ne.s32.totalorder %s87, %s88
    %p102 = scmp.eq.s32.totalorder %s14, 1
    %p103 = por %p101, %p102
    %p105 = scmp.ne.s32.totalorder %s88, %s104
    %p106 = scmp.eq.s32.totalorder %s14, 0
    %p107 = por %p105, %p106
    %p108 = scmp.le.s32.totalorder 1, %s8
    %p109 = scmp.lt.s32.totalorder %s8, 3
    %p110 = pnand %p108, %p109
    %p111 = pneg %p110
    // Predicated region
    $region9: #{conv_block.1} parent=5 // pred_check
      _
    $region10: #{conv_block.1} parent=5 // pred_check_branch
      %113 = sbr.rel (%p110) target = $region12
    $region11: #{conv_block.1} parent=5 // pred_region
      %s114 = ssub.s32 %s8, 1
      // Predicated region
      $region13: #{conv_block.1} parent=11 // pred_check
        %p115 = pneg %p72
      $region14: #{conv_block.1} parent=11 // pred_check_branch
        %117 = sbr.rel (%p115) target = $region16
      $region15: #{conv_block.1} parent=11 // pred_region
        %p118 = scmp.lt.s32.totalorder %s18, 0
        %s119 = scalar_select %p118, %s18, 0
        %s120 = smul.addr %s119, 4
        %s121 = scalar_lea.vmem %s1, %s120
      $region16: #{conv_block.1} parent=11 // pred_fallthru
        _
    $region12: #{conv_block.1} parent=5 // pred_fallthru
      _
    %p122 = scmp.lt.s32.totalorder %s8, 2
    // Predicated region
    $region17: #{conv_block.1} parent=5 // pred_check
      %p123 = pneg %p122
    $region18: #{conv_block.1} parent=5 // pred_check_branch
      %125 = sbr.rel (%p123) target = $region20
    $region19: #{conv_block.1} parent=5 // pred_region
      // Predicated region
      $region21: #{conv_block.1} parent=19 // pred_check
        %p126 = pneg %p40
      $region22: #{conv_block.1} parent=19 // pred_check_branch
        %128 = sbr.rel (%p126) target = $region24
      $region23: #{conv_block.1} parent=19 // pred_region
        %p129 = scmp.lt.s32.totalorder %s15, 1
        %s130 = scalar_select %p129, %s15, 1
        %s131 = smul.addr %s130, 8
        %s132 = smul.addr %s131, 4
        %s133 = scalar_lea.vmem %s0, %s132
      $region24: #{conv_block.1} parent=19 // pred_fallthru
        _
    $region20: #{conv_block.1} parent=5 // pred_fallthru
      _
    %p134 = scmp.le.s32.totalorder 1, %s8
    %p135 = scmp.lt.s32.totalorder %s8, 3
    %p136 = pnand %p134, %p135
    %p137 = pneg %p136
    // Predicated region
    $region25: #{conv_block.1} parent=5 // pred_check
      _
    $region26: #{conv_block.1} parent=5 // pred_check_branch
      %139 = sbr.rel (%p136) target = $region28
    $region27: #{conv_block.1} parent=5 // pred_region
      %s140 = ssub.s32 %s8, 1
      %p141 = scmp.lt.s32.totalorder %s17, 1
      %s142 = scalar_select %p141, %s17, 1
      %s143 = smul.addr %s142, 8
      %s144 = smul.addr %s143, 4
      %s145 = scalar_lea.vmem %s0, %s144
      %p146 = pneg %p46
      %p147 = pneg %p43
      %p148 = scmp.lt.s32.totalorder %s18, 0
      %s149 = scalar_select %p148, %s18, 0
      %s150 = smul.addr %s149, 4
      %s151 = scalar_lea.vmem %s1, %s150
      %p152 = pneg %p72
      %p153 = pneg %p69
      %p154 = pneg %p100
      %p155 = pneg %p97
      %p156 = scmp.lt.s32.totalorder %s17, 1
      %s157 = scalar_select %p156, %s17, 1
      %p158 = scmp.lt.s32.totalorder %s18, 0
      %s159 = scalar_select %p158, %s18, 0
      %s160 = smul.addr %s157, 8
      %s161 = sadd.s32 %s159, %s160
      %s162 = smul.addr %s161, 4
      %s163 = scalar_lea.vmem %s2, %s162
      %p164 = scmp.lt.s32.totalorder %s17, 1
      %s165 = scalar_select %p164, %s17, 1
      %s166 = smul.addr %s165, 8
      %s167 = smul.addr %s166, 4
      %s168 = scalar_lea.vmem %s0, %s167
      %p169 = scmp.lt.s32.totalorder %s18, 0
      %s170 = scalar_select %p169, %s18, 0
      %s171 = smul.addr %s170, 4
      %s172 = scalar_lea.vmem %s1, %s171
      %p173 = scmp.lt.s32.totalorder %s17, 1
      %s174 = scalar_select %p173, %s17, 1
      %p175 = scmp.lt.s32.totalorder %s18, 0
      %s176 = scalar_select %p175, %s18, 0
      %s177 = smul.addr %s174, 8
      %s178 = sadd.s32 %s176, %s177
      %s179 = smul.addr %s178, 4
      %s180 = scalar_lea.vmem %s2, %s179
      %v182 = vld [vmem:[%s172] sm:$0xf]
      %v183 = vld [vmem:[%s172 + $0x4] sm:$0xf]
      %v184 = vld [vmem:[%s172 + $0x8] sm:$0xf]
      %v185 = vld [vmem:[%s172 + $0xc] sm:$0xf]
      %v186 = vld [vmem:[%s172 + $0x10] sm:$0xf]
      %v187 = vld [vmem:[%s172 + $0x14] sm:$0xf]
      %v188 = vld [vmem:[%s172 + $0x18] sm:$0xf]
      %v189 = vld [vmem:[%s172 + $0x1c] sm:$0xf]
      %v190 = vld [vmem:[%s168] sm:$0xf]
      %v191 = vld [vmem:[%s168 + $0x4] sm:$0xf]
      %v192 = vld [vmem:[%s168 + $0x8] sm:$0xf]
      %v193 = vld [vmem:[%s168 + $0xc] sm:$0xf]
      %v194 = vld [vmem:[%s168 + $0x10] sm:$0xf]
      %v195 = vld [vmem:[%s168 + $0x14] sm:$0xf]
      %v196 = vld [vmem:[%s168 + $0x18] sm:$0xf]
      %v197 = vld [vmem:[%s168 + $0x1c] sm:$0xf]
      %v206 = vunpack.c.l.b16 %v190
      %v207 = vunpack.c.l.b16 %v191
      %v208 = vunpack.c.l.b16 %v192
      %v209 = vunpack.c.l.b16 %v193
      %v210 = vunpack.c.l.b16 %v194
      %v211 = vunpack.c.l.b16 %v195
      %v212 = vunpack.c.l.b16 %v196
      %v213 = vunpack.c.l.b16 %v197
      %v214 = vpack.c.b16 %v207, %v206
      %v215 = vpack.c.b16 %v209, %v208
      %v216 = vpack.c.b16 %v211, %v210
      %v217 = vpack.c.b16 %v213, %v212
      %v226 = vunpack.c.l.b16 %v182
      %v227 = vunpack.c.l.b16 %v183
      %v228 = vunpack.c.l.b16 %v184
      %v229 = vunpack.c.l.b16 %v185
      %v230 = vunpack.c.l.b16 %v186
      %v231 = vunpack.c.l.b16 %v187
      %v232 = vunpack.c.l.b16 %v188
      %v233 = vunpack.c.l.b16 %v189
      %v234 = vpack.c.b16 %v227, %v226
      %v235 = vpack.c.b16 %v229, %v228
      %v236 = vpack.c.b16 %v231, %v230
      %v237 = vpack.c.b16 %v233, %v232
      %vm242 = vcmask 523264
      %v244 = vsel %vm242, %v214, 0
      %v247 = vsel %vm242, %v215, 0
      %v250 = vsel %vm242, %v216, 0
      %v253 = vsel %vm242, %v217, 0
      %255 = vmatprep.subr.bf16.mxu0 0
      %256 = vmatpush1.bf16.msra.mxu0 %v234
      %257 = vmatprep.subr.bf16.mxu0 0
      %258 = vmatpush1.bf16.msra.mxu0 %v235
      %259 = vmatprep.subr.bf16.mxu0 0
      %260 = vmatpush1.bf16.msra.mxu0 %v236
      %261 = vmatprep.subr.bf16.mxu0 0
      %262 = vmatpush1.bf16.msra.mxu0 %v237
      %263 = vmatprep.subr.bf16.mxu0 0
      %264 = vmatpush1.bf16.msra.mxu0 0
      %265 = vmatprep.subr.bf16.mxu0 0
      %266 = vmatpush1.bf16.msra.mxu0 0
      %267 = vmatprep.subr.bf16.mxu0 0
      %268 = vmatpush1.bf16.msra.mxu0 0
      %269 = vmatprep.subr.bf16.mxu0 0
      %270 = vmatpush1.bf16.msra.mxu0 0
      %271 = vmatprep.subr.bf16.mxu0 0
      %272 = vmatpush1.bf16.msra.mxu0 0
      %273 = vmatprep.subr.bf16.mxu0 0
      %274 = vmatpush1.bf16.msra.mxu0 0
      %275 = vmatprep.subr.bf16.mxu0 0
      %276 = vmatpush1.bf16.msra.mxu0 0
      %277 = vmatprep.subr.bf16.mxu0 0
      %278 = vmatpush1.bf16.msra.mxu0 0
      %279 = vmatprep.subr.bf16.mxu0 0
      %280 = vmatpush1.bf16.msra.mxu0 0
      %281 = vmatprep.subr.bf16.mxu0 0
      %282 = vmatpush1.bf16.msra.mxu0 0
      %283 = vmatprep.subr.bf16.mxu0 0
      %284 = vmatpush1.bf16.msra.mxu0 0
      %285 = vmatprep.subr.bf16.mxu0 0
      %286 = vmatpush1.bf16.msra.mxu0 0
      %287 = vmatprep.mubr.bf16.mxu0 0
      %288 = vmatmul.mubr.bf16.gmra.mrb[0].mxu0 %v244
      %v289 = vpop.f32.mrb[0].mxu0
      %v290 = vadd.f32 0.0, %v289
      %v291 = vpop.f32.mrb[0].mxu0
      %v292 = vpop.f32.mrb[0].mxu0
      %v293 = vadd.f32 0.0, %v292
      %v294 = vpop.f32.mrb[0].mxu0
      %295 = vmatprep.mubr.bf16.mxu0 0
      %296 = vmatmul.mubr.bf16.gmra.mrb[0].mxu0 %v247
      %v297 = vpop.f32.mrb[0].mxu0
      %v298 = vadd.f32 0.0, %v297
      %v299 = vpop.f32.mrb[0].mxu0
      %v300 = vpop.f32.mrb[0].mxu0
      %v301 = vadd.f32 0.0, %v300
      %v302 = vpop.f32.mrb[0].mxu0
      %303 = vmatprep.mubr.bf16.mxu0 0
      %304 = vmatmul.mubr.bf16.gmra.mrb[0].mxu0 %v250
      %v305 = vpop.f32.mrb[0].mxu0
      %v306 = vadd.f32 0.0, %v305
      %v307 = vpop.f32.mrb[0].mxu0
      %v308 = vpop.f32.mrb[0].mxu0
      %v309 = vadd.f32 0.0, %v308
      %v310 = vpop.f32.mrb[0].mxu0
      %311 = vmatprep.mubr.bf16.mxu0 0
      %312 = vmatmul.mubr.bf16.gmra.mrb[0].mxu0 %v253
      %v313 = vpop.f32.mrb[0].mxu0
      %v314 = vadd.f32 0.0, %v313
      %v315 = vpop.f32.mrb[0].mxu0
      %v316 = vpop.f32.mrb[0].mxu0
      %v317 = vadd.f32 0.0, %v316
      %v318 = vpop.f32.mrb[0].mxu0
      %319 = vdwg.mxu0
      %v320 = vpack.c.bf16 %v293, %v290
      %v321 = vpack.c.bf16 %v301, %v298
      %v322 = vpack.c.bf16 %v309, %v306
      %v323 = vpack.c.bf16 %v317, %v314
      %v328 = vunpack.c.l.b16 %v320
      %v329 = vunpack.c.h.b16 %v320
      %v330 = vunpack.c.l.b16 %v321
      %v331 = vunpack.c.h.b16 %v321
      %v332 = vunpack.c.l.b16 %v322
      %v333 = vunpack.c.h.b16 %v322
      %v334 = vunpack.c.l.b16 %v323
      %v335 = vunpack.c.h.b16 %v323
      %v336 = vpack.c.b16 %v328, %v328
      %v337 = vpack.c.b16 %v329, %v329
      %v338 = vpack.c.b16 %v330, %v330
      %v339 = vpack.c.b16 %v331, %v331
      %v340 = vpack.c.b16 %v332, %v332
      %v341 = vpack.c.b16 %v333, %v333
      %v342 = vpack.c.b16 %v334, %v334
      %v343 = vpack.c.b16 %v335, %v335
      %352 = vst [vmem:[%s180] sm:$0xf] %v336
      %353 = vst [vmem:[%s180 + $0x4] sm:$0xf] %v337
      %354 = vst [vmem:[%s180 + $0x8] sm:$0xf] %v338
      %355 = vst [vmem:[%s180 + $0xc] sm:$0xf] %v339
      %356 = vst [vmem:[%s180 + $0x10] sm:$0xf] %v340
      %357 = vst [vmem:[%s180 + $0x14] sm:$0xf] %v341
      %358 = vst [vmem:[%s180 + $0x18] sm:$0xf] %v342
      %359 = vst [vmem:[%s180 + $0x1c] sm:$0xf] %v343
      %v360 = vadd.f32 %v290, %v293
      %v361 = vadd.f32 %v360, %v298
      %v362 = vadd.f32 %v361, %v301
      %v363 = vadd.f32 %v362, %v306
      %v364 = vadd.f32 %v363, %v309
      %v365 = vadd.f32 %v364, %v314
      %v366 = vadd.f32 %v365, %v317
      %v367 = vrot.slane %v366, 4
      %v368 = vadd.f32 %v366, %v367
      %v369 = vrot.slane %v368, 2
      %v370 = vadd.f32 %v368, %v369
      %v371 = vrot.slane %v370, 1
      %v372 = vadd.f32 %v370, %v371
      %v373 = vadd.f32 %v372, 0.0
      %v374 = vmul.f32 %v290, %v290
      %v375 = vmul.f32 %v293, %v293
      %v376 = vmul.f32 %v298, %v298
      %v377 = vmul.f32 %v301, %v301
      %v378 = vmul.f32 %v306, %v306
      %v379 = vmul.f32 %v309, %v309
      %v380 = vmul.f32 %v314, %v314
      %v381 = vmul.f32 %v317, %v317
      %v382 = vadd.f32 %v374, %v375
      %v383 = vadd.f32 %v382, %v376
      %v384 = vadd.f32 %v383, %v377
      %v385 = vadd.f32 %v384, %v378
      %v386 = vadd.f32 %v385, %v379
      %v387 = vadd.f32 %v386, %v380
      %v388 = vadd.f32 %v387, %v381
      %v389 = vrot.slane %v388, 4
      %v390 = vadd.f32 %v388, %v389
      %v391 = vrot.slane %v390, 2
      %v392 = vadd.f32 %v390, %v391
      %v393 = vrot.slane %v392, 1
      %v394 = vadd.f32 %v392, %v393
      %v395 = vadd.f32 %v394, 0.0
      %v396 = vmul.f32 %v373, 0.015625
      %v397 = vmul.f32 %v395, 0.015625
      %v398 = vmul.f32 %v396, %v396
      %v399 = vsub.f32 %v397, %v398
      %v400 = vmax.f32 %v399, 0.0
      %v401 = vadd.f32 %v400, 1e-05
      %v402 = vrsqrt.pop %v401
      %v403 = vmul.f32 %v402, 0.2
      %v404 = vld [vmem:[%s180] sm:$0xf]
      %v405 = vld [vmem:[%s180 + $0x4] sm:$0xf]
      %v406 = vld [vmem:[%s180 + $0x8] sm:$0xf]
      %v407 = vld [vmem:[%s180 + $0xc] sm:$0xf]
      %v408 = vld [vmem:[%s180 + $0x10] sm:$0xf]
      %v409 = vld [vmem:[%s180 + $0x14] sm:$0xf]
      %v410 = vld [vmem:[%s180 + $0x18] sm:$0xf]
      %v411 = vld [vmem:[%s180 + $0x1c] sm:$0xf]
      %v412 = vunpack.c.l.bf16 %v404
      %v413 = vunpack.c.l.bf16 %v405
      %v414 = vunpack.c.l.bf16 %v406
      %v415 = vunpack.c.l.bf16 %v407
      %v416 = vunpack.c.l.bf16 %v408
      %v417 = vunpack.c.l.bf16 %v409
      %v418 = vunpack.c.l.bf16 %v410
      %v419 = vunpack.c.l.bf16 %v411
      %v420 = vsub.f32 %v412, %v396
      %v421 = vsub.f32 %v413, %v396
      %v422 = vsub.f32 %v414, %v396
      %v423 = vsub.f32 %v415, %v396
      %v424 = vsub.f32 %v416, %v396
      %v425 = vsub.f32 %v417, %v396
      %v426 = vsub.f32 %v418, %v396
      %v427 = vsub.f32 %v419, %v396
      %vm428 = vcmp.ge.f32.partialorder %v420, 0.0
      %vm429 = vcmp.ge.f32.partialorder %v421, 0.0
      %vm430 = vcmp.ge.f32.partialorder %v422, 0.0
      %vm431 = vcmp.ge.f32.partialorder %v423, 0.0
      %vm432 = vcmp.ge.f32.partialorder %v424, 0.0
      %vm433 = vcmp.ge.f32.partialorder %v425, 0.0
      %vm434 = vcmp.ge.f32.partialorder %v426, 0.0
      %vm435 = vcmp.ge.f32.partialorder %v427, 0.0
      %v436 = vsel %vm428, %v402, %v403
      %v437 = vsel %vm429, %v402, %v403
      %v438 = vsel %vm430, %v402, %v403
      %v439 = vsel %vm431, %v402, %v403
      %v440 = vsel %vm432, %v402, %v403
      %v441 = vsel %vm433, %v402, %v403
      %v442 = vsel %vm434, %v402, %v403
      %v443 = vsel %vm435, %v402, %v403
      %v444 = vmul.f32 %v420, %v436
      %v445 = vmul.f32 %v421, %v437
      %v446 = vmul.f32 %v422, %v438
      %v447 = vmul.f32 %v423, %v439
      %v448 = vmul.f32 %v424, %v440
      %v449 = vmul.f32 %v425, %v441
      %v450 = vmul.f32 %v426, %v442
      %v451 = vmul.f32 %v427, %v443
      %v452 = vpack.c.bf16 %v445, %v444
      %v453 = vpack.c.bf16 %v447, %v446
      %v454 = vpack.c.bf16 %v449, %v448
      %v455 = vpack.c.bf16 %v451, %v450
      %v460 = vunpack.c.l.b16 %v452
      %v461 = vunpack.c.h.b16 %v452
      %v462 = vunpack.c.l.b16 %v453
      %v463 = vunpack.c.h.b16 %v453
      %v464 = vunpack.c.l.b16 %v454
      %v465 = vunpack.c.h.b16 %v454
      %v466 = vunpack.c.l.b16 %v455
      %v467 = vunpack.c.h.b16 %v455
      %v468 = vpack.c.b16 %v460, %v460
      %v469 = vpack.c.b16 %v461, %v461
      %v470 = vpack.c.b16 %v462, %v462
      %v471 = vpack.c.b16 %v463, %v463
      %v472 = vpack.c.b16 %v464, %v464
      %v473 = vpack.c.b16 %v465, %v465
      %v474 = vpack.c.b16 %v466, %v466
      %v475 = vpack.c.b16 %v467, %v467
      %484 = vst [vmem:[%s180] sm:$0xf] %v468
      %485 = vst [vmem:[%s180 + $0x4] sm:$0xf] %v469
      %486 = vst [vmem:[%s180 + $0x8] sm:$0xf] %v470
      %487 = vst [vmem:[%s180 + $0xc] sm:$0xf] %v471
      %488 = vst [vmem:[%s180 + $0x10] sm:$0xf] %v472
      %489 = vst [vmem:[%s180 + $0x14] sm:$0xf] %v473
      %490 = vst [vmem:[%s180 + $0x18] sm:$0xf] %v474
      %491 = vst [vmem:[%s180 + $0x1c] sm:$0xf] %v475
      %p492 = scmp.lt.s32.totalorder %s17, 1
      %s493 = scalar_select %p492, %s17, 1
      %p494 = scmp.lt.s32.totalorder %s18, 0
      %s495 = scalar_select %p494, %s18, 0
      %s496 = smul.addr %s493, 8
      %s497 = sadd.s32 %s495, %s496
      %s498 = smul.addr %s497, 4
      %s499 = scalar_lea.vmem %s2, %s498
      // Predicated region
      $region29: #{conv_block.1} parent=27 // pred_check
        %p500 = pneg %p97
      $region30: #{conv_block.1} parent=27 // pred_check_branch
        %502 = sbr.rel (%p500) target = $region32
      $region31: #{conv_block.1} parent=27 // pred_region
        _
      $region32: #{conv_block.1} parent=27 // pred_fallthru
        _
    $region28: #{conv_block.1} parent=5 // pred_fallthru
      _
    %p503 = scmp.le.s32.totalorder 2, %s8
    // Predicated region
    $region33: #{conv_block.1} parent=5 // pred_check
      %p504 = pneg %p503
    $region34: #{conv_block.1} parent=5 // pred_check_branch
      %506 = sbr.rel (%p504) target = $region36
    $region35: #{conv_block.1} parent=5 // pred_region
      %s507 = ssub.s32 %s8, 2
      // Predicated region
      $region37: #{conv_block.1} parent=35 // pred_check
        %p508 = pneg %p103
      $region38: #{conv_block.1} parent=35 // pred_check_branch
        %510 = sbr.rel (%p508) target = $region40
      $region39: #{conv_block.1} parent=35 // pred_region
        %p511 = scmp.lt.s32.totalorder %s19, 1
        %s512 = scalar_select %p511, %s19, 1
        %p513 = scmp.lt.s32.totalorder %s20, 0
        %s514 = scalar_select %p513, %s20, 0
        %s515 = smul.addr %s512, 8
        %s516 = sadd.s32 %s514, %s515
        %s517 = smul.addr %s516, 4
        %s518 = scalar_lea.vmem %s2, %s517
      $region40: #{conv_block.1} parent=35 // pred_fallthru
        _
    $region36: #{conv_block.1} parent=5 // pred_fallthru
      _
  $region6: #{conv_block.1} parent=0 // loop_footer
    %s12 = sadd.s32 1, %s8
  $region7: #{conv_block.1} parent=0 // loop_footer_branch
    %7 = sbr.rel target = $region3
  $region8: #{conv_block.1} parent=0 // loop_exit
    _

</llo_original>
